<compile_context>
chip_gen: v6e
topology: v6e:2x2x1
jax: 0.10.0
libtpu: 0.0.40
codegen_flags: <defaults>
</compile_context>

<pallas_src>
import numpy as np
import jax
import jax.numpy as jnp
from jax.experimental import pallas as pl
from jax.experimental.pallas import tpu as pltpu


_LANES = 128
_SUB = 16                          # sublane granularity friendly to both f32 and bf16
_VMEM_BUDGET = 12 * 1024 * 1024    # target double-buffered in+out bytes per grid step


def _round_up(a, b):
    return (a + b - 1) // b * b


def _cdiv(a, b):
    return -(-a // b)


def make_pos_embedding(in_channels, N_freqs, logscale=True, alpha=-1.0,
                       tb_sublanes=512, reseed_every=3, interleave=True):
    """Returns (embed_fn, out_channels) mirroring PosEmbedding.forward.

    interleave=True  -> exact PyTorch layout (..., in_channels*(1+2*N_freqs)).
    interleave=False -> band-major layout (1+2*N_freqs, ..., in_channels); same values,
                        no wrapper transpose (fast path for fused consumers).
    """
    if N_freqs == -1:
        return (lambda x: jnp.zeros(x.shape[:-1] + (0,), x.dtype)), 0
    if N_freqs == 0:
        return (lambda x: x), in_channels

    nfuncs = 2
    n_bands = 1 + nfuncs * N_freqs
    out_channels = in_channels * n_bands

    # Deterministic "buffers" (same as the PyTorch __init__), baked at trace time.
    if logscale:
        freq_bands = (2.0 ** np.linspace(0, N_freqs - 1, N_freqs)).astype(np.float64)
    else:
        freq_bands = np.linspace(1, 2 ** (N_freqs - 1), N_freqs).astype(np.float64)

    # Annealing window (apply_annealing), resolved at trace time (alpha<0 -> all ones,
    # no multiplies emitted).
    if alpha >= 0:
        w = np.clip(alpha * N_freqs - np.arange(N_freqs), 0.0, 1.0)
        window = 0.5 * (1.0 + np.cos(np.pi * w + np.pi))
    else:
        window = np.ones(N_freqs)

    # Double-angle recurrence is only valid when consecutive freqs differ by exactly 2x.
    use_recurrence = bool(logscale) and N_freqs > 1

    def embed(x):
        assert x.shape[-1] == in_channels, (x.shape, in_channels)
        orig_shape = x.shape
        dtype = x.dtype
        itemsize = jnp.dtype(dtype).itemsize

        xf = x.reshape(-1)                       # flat scalars, channel innermost
        n = xf.shape[0]
        rows = max(_cdiv(n, _LANES), 1)

        # --- Block-size derivation -------------------------------------------------
        # Cap tb so the double-buffered (input + n_bands output) footprint fits the
        # VMEM budget on every generation, balance blocks so padding is at most one
        # _SUB strip per block, and force >=2 grid steps (megacore on v7x) when the
        # input is big enough to split.
        tb_cap = (_VMEM_BUDGET // (2 * (1 + n_bands) * _LANES * itemsize))
        tb_cap = max(_SUB, (tb_cap // _SUB) * _SUB)
        tb_max = max(_SUB, min(_round_up(int(tb_sublanes), _SUB), tb_cap))
        nblocks = _cdiv(rows, tb_max)
        if nblocks < 2 and rows > _SUB:
            nblocks = 2
        tb = _round_up(_cdiv(rows, nblocks), _SUB)
        r_pad = tb * nblocks
        n_pad = r_pad * _LANES
        if n_pad != n:
            xf = jnp.pad(xf, (0, n_pad - n))
        x2 = xf.reshape(r_pad, _LANES)

        # Strip size for in-kernel strip-mining (largest of 64/32/16 dividing tb).
        strip = 64 if tb % 64 == 0 else (32 if tb % 32 == 0 else _SUB)
        n_strips = tb // strip

        def kernel(x_ref, o_ref):
            # x_ref: (tb, 128) dense tile of the flattened input scalars.
            # o_ref: (n_bands, tb, 128); band 0 = identity, 1+2f = sin, 2+2f = cos.
            # Strip-mine so only O(strip) rows of f32 temporaries are live at a time.
            for si in range(n_strips):
                rs = pl.ds(si * strip, strip)    # static slice -> zero runtime cost
                xv = x_ref[rs, :]
                o_ref[0, rs, :] = xv             # identity band: straight copy, no cast
                v = xv.astype(jnp.float32)
                s = c = None
                for f in range(N_freqs):
                    if (not use_recurrence) or (f % reseed_every == 0):
                        fb = float(freq_bands[f])
                        sig = v if fb == 1.0 else fb * v
                        s = jnp.sin(sig)
                        c = jnp.cos(sig)
                    else:
                        # freq doubles each octave: ~5 VALU ops instead of two
                        # polynomial sin/cos expansions.
                        s, c = 2.0 * (s * c), c * c - s * s
                    wf = float(window[f])        # trace-time: no mul when window == 1
                    ws = s if wf == 1.0 else wf * s
                    wc = c if wf == 1.0 else wf * c
                    o_ref[1 + 2 * f, rs, :] = ws.astype(o_ref.dtype)
                    o_ref[2 + 2 * f, rs, :] = wc.astype(o_ref.dtype)

        n_seeds = len(range(0, N_freqs, reseed_every)) if use_recurrence else N_freqs
        cost = pl.CostEstimate(
            flops=int(n_pad) * (8 * N_freqs),
            transcendentals=2 * n_seeds * int(n_pad),
            bytes_accessed=(1 + n_bands) * int(n_pad) * itemsize,
        )

        vmem_need = 2 * (1 + n_bands) * tb * _LANES * itemsize   # double-buffered blocks
        vmem_limit = int(min(48 << 20, max(16 << 20, 3 * vmem_need)))

        out = pl.pallas_call(
            kernel,
            out_shape=jax.ShapeDtypeStruct((n_bands, r_pad, _LANES), dtype),
            grid_spec=pltpu.PrefetchScalarGridSpec(
                num_scalar_prefetch=0,
                grid=(nblocks,),
                in_specs=[pl.BlockSpec((tb, _LANES), lambda i: (i, 0))],
                out_specs=pl.BlockSpec((n_bands, tb, _LANES), lambda i: (0, i, 0)),
            ),
            compiler_params=pltpu.CompilerParams(
                dimension_semantics=("parallel",),
                vmem_limit_bytes=vmem_limit),
            cost_estimate=cost,
        )(x2)

        out = out.reshape(n_bands, n_pad)[:, :n]
        if not interleave:
            # Band-major fast path: no extra HBM round trip of the amplified output.
            return out.reshape((n_bands,) + orig_shape)
        # Exact PyTorch ordering [x, sin(f0 x), cos(f0 x), ...] channel-minor per point
        # (wrapper-side transpose; avoid by using interleave=False in fused consumers).
        out = out.reshape(n_bands, n // in_channels, in_channels)
        out = jnp.transpose(out, (1, 0, 2))
        return out.reshape(orig_shape[:-1] + (out_channels,))

    return embed, out_channels


def pos_embedding_ref(x, in_channels, N_freqs, logscale=True, alpha=-1.0):
    """Pure-JAX reference of PosEmbedding.forward for verification."""
    shape = x.shape
    x2 = x.reshape(-1, in_channels).astype(jnp.float32)
    if logscale:
        freq_bands = 2.0 ** jnp.linspace(0, N_freqs - 1, N_freqs)
    else:
        freq_bands = jnp.linspace(1, 2 ** (N_freqs - 1), N_freqs)
    sig = freq_bands[None, :, None] * x2[:, None, :]            # (B, N, C)
    bands = jnp.stack([jnp.sin(sig), jnp.cos(sig)], axis=2)     # (B, N, 2, C)
    if alpha >= 0:
        w = jnp.clip(alpha * N_freqs - jnp.arange(N_freqs), 0.0, 1.0)
        win = 0.5 * (1.0 + jnp.cos(jnp.pi * w + jnp.pi))
        bands = win[None, :, None, None] * bands
    out = jnp.concatenate([x2, bands.reshape(x2.shape[0], -1)], axis=-1)
    out_ch = in_channels * (2 * N_freqs + 1)
    return out.reshape(shape[:-1] + (out_ch,))


if __name__ == "__main__":
    in_channels = 3
    N_freqs = 6

    key = jax.random.PRNGKey(0)
    # Small example consistent with the module: (..., in_channels) points.
    x = jax.random.normal(key, (2, 100, in_channels), dtype=jnp.float32)

    embed, out_channels = make_pos_embedding(in_channels, N_freqs, logscale=True)
    y = jax.block_until_ready(embed(x))

    assert y.shape == (2, 100, out_channels), y.shape
    assert y.dtype == x.dtype, y.dtype

    y_ref = pos_embedding_ref(x, in_channels, N_freqs, logscale=True)
    # Double-angle recurrence differs from direct f32 sin/cos by a few ulps per octave.
    np.testing.assert_allclose(np.asarray(y), np.asarray(y_ref), rtol=5e-5, atol=5e-5)

    # Band-major fast path: identical values, just no wrapper transpose.
    embed_bm, _ = make_pos_embedding(in_channels, N_freqs, logscale=True,
                                     interleave=False)
    y_bm = jax.block_until_ready(embed_bm(x))
    y_bm_il = np.moveaxis(np.asarray(y_bm), 0, -2).reshape(2, 100, out_channels)
    np.testing.assert_array_equal(y_bm_il, np.asarray(y))

    # bf16 path: dtype preserved end-to-end, math still done in f32 inside the kernel.
    x_bf16 = x.astype(jnp.bfloat16)
    y_bf16 = jax.block_until_ready(embed(x_bf16))
    assert y_bf16.dtype == jnp.bfloat16 and y_bf16.shape == y.shape
    y_bf16_ref = pos_embedding_ref(x_bf16, in_channels, N_freqs, logscale=True)
    np.testing.assert_allclose(
        np.asarray(y_bf16.astype(jnp.float32)),
        np.asarray(y_bf16_ref.astype(jnp.float32)),
        rtol=0.05, atol=0.02)

    print("KERNEL_OK")
</pallas_src>

<mosaic_0001>
module attributes {stable_mosaic.version = 11 : i64} {
  func.func @kernel(%arg0: i32, %arg1: memref<16x128xf32, #tpu.memory_space<vmem>>, %arg2: memref<13x16x128xf32, #tpu.memory_space<vmem>>) attributes {dimension_semantics = [#tpu.dimension_semantics<parallel>], iteration_bounds = array<i64: 1>, scalar_prefetch = 0 : i64, scratch_operands = 0 : i64, tpu.core_type = #tpu.core_type<tc>, window_params = [{transform_indices = @transform_0, window_bounds = array<i64: 16, 128>}, {transform_indices = @transform_1, window_bounds = array<i64: 13, 16, 128>}]} {
    %c0 = arith.constant 0 : index
    %c0_0 = arith.constant 0 : index
    %0 = vector.load %arg1[%c0, %c0_0] : memref<16x128xf32, #tpu.memory_space<vmem>>, vector<16x128xf32>
    %c0_1 = arith.constant 0 : index
    %c0_2 = arith.constant 0 : index
    %c0_3 = arith.constant 0 : index
    %1 = vector.load %arg2[%c0_1, %c0_2, %c0_3] : memref<13x16x128xf32, #tpu.memory_space<vmem>>, vector<1x16x128xf32>
    %2 = vector.shape_cast %1 : vector<1x16x128xf32> to vector<16x128xf32>
    %3 = vector.shape_cast %0 : vector<16x128xf32> to vector<1x16x128xf32>
    tpu.vector_store %arg2[%c0_1, %c0_2, %c0_3], %3 {strides = array<i32>} : memref<13x16x128xf32, #tpu.memory_space<vmem>>, vector<1x16x128xf32>,
    %4 = math.sin %0 : vector<16x128xf32>
    %5 = math.cos %0 : vector<16x128xf32>
    %c1 = arith.constant 1 : index
    %c0_4 = arith.constant 0 : index
    %c0_5 = arith.constant 0 : index
    %6 = vector.load %arg2[%c1, %c0_4, %c0_5] : memref<13x16x128xf32, #tpu.memory_space<vmem>>, vector<1x16x128xf32>
    %7 = vector.shape_cast %6 : vector<1x16x128xf32> to vector<16x128xf32>
    %8 = vector.shape_cast %4 : vector<16x128xf32> to vector<1x16x128xf32>
    tpu.vector_store %arg2[%c1, %c0_4, %c0_5], %8 {strides = array<i32>} : memref<13x16x128xf32, #tpu.memory_space<vmem>>, vector<1x16x128xf32>,
    %c2 = arith.constant 2 : index
    %c0_6 = arith.constant 0 : index
    %c0_7 = arith.constant 0 : index
    %9 = vector.load %arg2[%c2, %c0_6, %c0_7] : memref<13x16x128xf32, #tpu.memory_space<vmem>>, vector<1x16x128xf32>
    %10 = vector.shape_cast %9 : vector<1x16x128xf32> to vector<16x128xf32>
    %11 = vector.shape_cast %5 : vector<16x128xf32> to vector<1x16x128xf32>
    tpu.vector_store %arg2[%c2, %c0_6, %c0_7], %11 {strides = array<i32>} : memref<13x16x128xf32, #tpu.memory_space<vmem>>, vector<1x16x128xf32>,
    %12 = arith.mulf %4, %5 : vector<16x128xf32>
    %cst = arith.constant 2.000000e+00 : f32
    %13 = vector.broadcast %cst : f32 to vector<16x128xf32>
    %14 = arith.mulf %13, %12 : vector<16x128xf32>
    %15 = arith.mulf %5, %5 : vector<16x128xf32>
    %16 = arith.mulf %4, %4 : vector<16x128xf32>
    %17 = arith.subf %15, %16 : vector<16x128xf32>
    %c3 = arith.constant 3 : index
    %c0_8 = arith.constant 0 : index
    %c0_9 = arith.constant 0 : index
    %18 = vector.load %arg2[%c3, %c0_8, %c0_9] : memref<13x16x128xf32, #tpu.memory_space<vmem>>, vector<1x16x128xf32>
    %19 = vector.shape_cast %18 : vector<1x16x128xf32> to vector<16x128xf32>
    %20 = vector.shape_cast %14 : vector<16x128xf32> to vector<1x16x128xf32>
    tpu.vector_store %arg2[%c3, %c0_8, %c0_9], %20 {strides = array<i32>} : memref<13x16x128xf32, #tpu.memory_space<vmem>>, vector<1x16x128xf32>,
    %c4 = arith.constant 4 : index
    %c0_10 = arith.constant 0 : index
    %c0_11 = arith.constant 0 : index
    %21 = vector.load %arg2[%c4, %c0_10, %c0_11] : memref<13x16x128xf32, #tpu.memory_space<vmem>>, vector<1x16x128xf32>
    %22 = vector.shape_cast %21 : vector<1x16x128xf32> to vector<16x128xf32>
    %23 = vector.shape_cast %17 : vector<16x128xf32> to vector<1x16x128xf32>
    tpu.vector_store %arg2[%c4, %c0_10, %c0_11], %23 {strides = array<i32>} : memref<13x16x128xf32, #tpu.memory_space<vmem>>, vector<1x16x128xf32>,
    %24 = arith.mulf %14, %17 : vector<16x128xf32>
    %cst_12 = arith.constant 2.000000e+00 : f32
    %25 = vector.broadcast %cst_12 : f32 to vector<16x128xf32>
    %26 = arith.mulf %25, %24 : vector<16x128xf32>
    %27 = arith.mulf %17, %17 : vector<16x128xf32>
    %28 = arith.mulf %14, %14 : vector<16x128xf32>
    %29 = arith.subf %27, %28 : vector<16x128xf32>
    %c5 = arith.constant 5 : index
    %c0_13 = arith.constant 0 : index
    %c0_14 = arith.constant 0 : index
    %30 = vector.load %arg2[%c5, %c0_13, %c0_14] : memref<13x16x128xf32, #tpu.memory_space<vmem>>, vector<1x16x128xf32>
    %31 = vector.shape_cast %30 : vector<1x16x128xf32> to vector<16x128xf32>
    %32 = vector.shape_cast %26 : vector<16x128xf32> to vector<1x16x128xf32>
    tpu.vector_store %arg2[%c5, %c0_13, %c0_14], %32 {strides = array<i32>} : memref<13x16x128xf32, #tpu.memory_space<vmem>>, vector<1x16x128xf32>,
    %c6 = arith.constant 6 : index
    %c0_15 = arith.constant 0 : index
    %c0_16 = arith.constant 0 : index
    %33 = vector.load %arg2[%c6, %c0_15, %c0_16] : memref<13x16x128xf32, #tpu.memory_space<vmem>>, vector<1x16x128xf32>
    %34 = vector.shape_cast %33 : vector<1x16x128xf32> to vector<16x128xf32>
    %35 = vector.shape_cast %29 : vector<16x128xf32> to vector<1x16x128xf32>
    tpu.vector_store %arg2[%c6, %c0_15, %c0_16], %35 {strides = array<i32>} : memref<13x16x128xf32, #tpu.memory_space<vmem>>, vector<1x16x128xf32>,
    %cst_17 = arith.constant 8.000000e+00 : f32
    %36 = vector.broadcast %cst_17 : f32 to vector<16x128xf32>
    %37 = arith.mulf %36, %0 : vector<16x128xf32>
    %38 = math.sin %37 : vector<16x128xf32>
    %39 = math.cos %37 : vector<16x128xf32>
    %c7 = arith.constant 7 : index
    %c0_18 = arith.constant 0 : index
    %c0_19 = arith.constant 0 : index
    %40 = vector.load %arg2[%c7, %c0_18, %c0_19] : memref<13x16x128xf32, #tpu.memory_space<vmem>>, vector<1x16x128xf32>
    %41 = vector.shape_cast %40 : vector<1x16x128xf32> to vector<16x128xf32>
    %42 = vector.shape_cast %38 : vector<16x128xf32> to vector<1x16x128xf32>
    tpu.vector_store %arg2[%c7, %c0_18, %c0_19], %42 {strides = array<i32>} : memref<13x16x128xf32, #tpu.memory_space<vmem>>, vector<1x16x128xf32>,
    %c8 = arith.constant 8 : index
    %c0_20 = arith.constant 0 : index
    %c0_21 = arith.constant 0 : index
    %43 = vector.load %arg2[%c8, %c0_20, %c0_21] : memref<13x16x128xf32, #tpu.memory_space<vmem>>, vector<1x16x128xf32>
    %44 = vector.shape_cast %43 : vector<1x16x128xf32> to vector<16x128xf32>
    %45 = vector.shape_cast %39 : vector<16x128xf32> to vector<1x16x128xf32>
    tpu.vector_store %arg2[%c8, %c0_20, %c0_21], %45 {strides = array<i32>} : memref<13x16x128xf32, #tpu.memory_space<vmem>>, vector<1x16x128xf32>,
    %46 = arith.mulf %38, %39 : vector<16x128xf32>
    %cst_22 = arith.constant 2.000000e+00 : f32
    %47 = vector.broadcast %cst_22 : f32 to vector<16x128xf32>
    %48 = arith.mulf %47, %46 : vector<16x128xf32>
    %49 = arith.mulf %39, %39 : vector<16x128xf32>
    %50 = arith.mulf %38, %38 : vector<16x128xf32>
    %51 = arith.subf %49, %50 : vector<16x128xf32>
    %c9 = arith.constant 9 : index
    %c0_23 = arith.constant 0 : index
    %c0_24 = arith.constant 0 : index
    %52 = vector.load %arg2[%c9, %c0_23, %c0_24] : memref<13x16x128xf32, #tpu.memory_space<vmem>>, vector<1x16x128xf32>
    %53 = vector.shape_cast %52 : vector<1x16x128xf32> to vector<16x128xf32>
    %54 = vector.shape_cast %48 : vector<16x128xf32> to vector<1x16x128xf32>
    tpu.vector_store %arg2[%c9, %c0_23, %c0_24], %54 {strides = array<i32>} : memref<13x16x128xf32, #tpu.memory_space<vmem>>, vector<1x16x128xf32>,
    %c10 = arith.constant 10 : index
    %c0_25 = arith.constant 0 : index
    %c0_26 = arith.constant 0 : index
    %55 = vector.load %arg2[%c10, %c0_25, %c0_26] : memref<13x16x128xf32, #tpu.memory_space<vmem>>, vector<1x16x128xf32>
    %56 = vector.shape_cast %55 : vector<1x16x128xf32> to vector<16x128xf32>
    %57 = vector.shape_cast %51 : vector<16x128xf32> to vector<1x16x128xf32>
    tpu.vector_store %arg2[%c10, %c0_25, %c0_26], %57 {strides = array<i32>} : memref<13x16x128xf32, #tpu.memory_space<vmem>>, vector<1x16x128xf32>,
    %58 = arith.mulf %48, %51 : vector<16x128xf32>
    %cst_27 = arith.constant 2.000000e+00 : f32
    %59 = vector.broadcast %cst_27 : f32 to vector<16x128xf32>
    %60 = arith.mulf %59, %58 : vector<16x128xf32>
    %61 = arith.mulf %51, %51 : vector<16x128xf32>
    %62 = arith.mulf %48, %48 : vector<16x128xf32>
    %63 = arith.subf %61, %62 : vector<16x128xf32>
    %c11 = arith.constant 11 : index
    %c0_28 = arith.constant 0 : index
    %c0_29 = arith.constant 0 : index
    %64 = vector.load %arg2[%c11, %c0_28, %c0_29] : memref<13x16x128xf32, #tpu.memory_space<vmem>>, vector<1x16x128xf32>
    %65 = vector.shape_cast %64 : vector<1x16x128xf32> to vector<16x128xf32>
    %66 = vector.shape_cast %60 : vector<16x128xf32> to vector<1x16x128xf32>
    tpu.vector_store %arg2[%c11, %c0_28, %c0_29], %66 {strides = array<i32>} : memref<13x16x128xf32, #tpu.memory_space<vmem>>, vector<1x16x128xf32>,
    %c12 = arith.constant 12 : index
    %c0_30 = arith.constant 0 : index
    %c0_31 = arith.constant 0 : index
    %67 = vector.load %arg2[%c12, %c0_30, %c0_31] : memref<13x16x128xf32, #tpu.memory_space<vmem>>, vector<1x16x128xf32>
    %68 = vector.shape_cast %67 : vector<1x16x128xf32> to vector<16x128xf32>
    %69 = vector.shape_cast %63 : vector<16x128xf32> to vector<1x16x128xf32>
    tpu.vector_store %arg2[%c12, %c0_30, %c0_31], %69 {strides = array<i32>} : memref<13x16x128xf32, #tpu.memory_space<vmem>>, vector<1x16x128xf32>,
    return
  }
  func.func @transform_0(%arg0: i32) -> (i32, i32) {
    %c0_i32 = arith.constant 0 : i32
    %c0_i32_0 = arith.constant 0 : i32
    return %arg0, %c0_i32 : i32, i32
  }
  func.func @transform_1(%arg0: i32) -> (i32, i32, i32) {
    %c0_i32 = arith.constant 0 : i32
    %c0_i32_0 = arith.constant 0 : i32
    %c0_i32_1 = arith.constant 0 : i32
    return %c0_i32, %arg0, %c0_i32_0 : i32, i32, i32
  }
}

</mosaic_0001>

<llo_original>
// kernel: tpu_custom_call.1
$region0: #{tpu_custom_call.1}
  #allocation0 [shape = 'u32[]', space=smem, size = 0x4, offset = 0x4, fixed_abs, tag = 'smem constant byte address 0x4 - core index']
  #allocation1 [shape = 'u32[144,128]{1,0:T(1,128)}', space=vmem, size = 0x12000, scoped, tag = 'internal scratch']
  %s0 = inlined_call_operand.hbm [shape: f32[16,128], index: 0, kind: input, shape index: {}]
  %s1 = inlined_call_operand.hbm [shape: f32[13,16,128], index: 1, kind: output, shape index: {}]
  %s2 = sld [smem:[#allocation0]]
  $region18: #{tpu_custom_call.1} parent=0
    _
  %s4 = ssub.s32 1, %s2
  %s5 = scalar_select 0, %s4, %s2
  $region1: #{tpu_custom_call.1} parent=0
    #allocation2 [shape = 'u8[8192]{0}', space=vmem, size = 0x2000, scoped, tag = 'input window, operand 0, single buffered']
    #allocation3 [shape = 's32[1]{0}', space=sflag, size = 0x4, scoped, tag = 'scoped memory for tpu_custom_call.1']
    #allocation4 [shape = 's32[1]{0}', space=sflag, size = 0x4, scoped, tag = 'scoped memory for tpu_custom_call.1']
    #allocation5 [shape = 'u8[106496]{0}', space=vmem, size = 0x1a000, scoped, tag = 'output window, operand 0, single buffered']
    %6 = vsyncpa [#allocation3], 0
    %7 = vsyncpa [#allocation4], 0
    // Predicated region
    $region2: #{tpu_custom_call.1} parent=1 // pred_check
      _
    $region3: #{tpu_custom_call.1} parent=1 // pred_check_branch
      %9 = sbr.rel (0) target = $region5
    $region4: #{tpu_custom_call.1} parent=1 // pred_region
      %s11 = ssub.s32 256, 256
      %12 = vsyncadd [#allocation3], %s11
      %s13 = sshll.u32 [#allocation2], 4
      %s14 = int_to_ptr.vmem [resolvable:$true] %s13
      %19 = dma.hbm_to_vmem [thread:$0]  %s0, 256, %s14, [#allocation3], 128, 128, 8
    $region5: #{tpu_custom_call.1} parent=1 // pred_fallthru
      _
    // Predicated region
    $region6: #{tpu_custom_call.1} parent=1 // pred_check
      _
    $region7: #{tpu_custom_call.1} parent=1 // pred_check_branch
      %21 = sbr.rel (0) target = $region9
    $region8: #{tpu_custom_call.1} parent=1 // pred_region
      %22 = dma.done [#allocation3], 256
    $region9: #{tpu_custom_call.1} parent=1 // pred_fallthru
      _
    %v23 = vld [vmem:[#allocation2] sm:$0xff]
    %v24 = vld [vmem:[#allocation2 + $0x8] sm:$0xff]
    %25 = vst [vmem:[#allocation5] sm:$0xff] %v23
    %26 = vst [vmem:[#allocation5 + $0x8] sm:$0xff] %v24
    %v27 = vand.u32 2147483647, %v23
    %vm28 = vcmp.le.f32.partialorder %v27, 0.7853982
    %vm29 = vcmp.lt.s32.totalorder %v23, 0
    %v30 = vand.u32 %v23, 2139095040
    %v31 = vshrl.u32 %v30, 23
    %v32 = vsub.s32 %v31, 127
    %v33 = vand.u32 2147483647, %v23
    %v34 = vand.u32 %v33, 8388607
    %v35 = vor.u32 %v34, 8388608
    %v36 = vsub.s32 0, %v35
    %v37 = vadd.s32 %v32, 1
    %vm38 = vcmp.gt.s32.totalorder %v37, 0
    %v39 = vsel %vm38, %v37, 0
    %v40 = vshrl.u32 %v39, 5
    %v41 = vand.u32 %v39, 31
    %v42 = vsub.s32 32, %v41
    %v43 = vshrl.u32 683565275, %v42
    %v44 = vshll.u32 683565275, %v41
    %v45 = vshrl.u32 2475754826, %v42
    %v46 = vor.u32 %v44, %v45
    %v47 = vshll.u32 2475754826, %v41
    %v48 = vshrl.u32 2131351028, %v42
    %v49 = vor.u32 %v47, %v48
    %v50 = vshll.u32 2131351028, %v41
    %v51 = vshrl.u32 2102212464, %v42
    %v52 = vor.u32 %v50, %v51
    %v53 = vshll.u32 2102212464, %v41
    %v54 = vshrl.u32 920167782, %v42
    %v55 = vor.u32 %v53, %v54
    %v56 = vshll.u32 920167782, %v41
    %v57 = vshrl.u32 1326507024, %v42
    %v58 = vor.u32 %v56, %v57
    %vm59 = vcmp.lt.s32.totalorder %v40, 1
    %vm60 = vcmp.lt.s32.totalorder %v40, 2
    %vm61 = vcmp.lt.s32.totalorder %v40, 3
    %vm62 = vcmp.lt.s32.totalorder %v40, 4
    %v63 = vsel %vm59, %v43, %v46
    %v64 = vsel %vm62, %v52, 2102212464
    %v65 = vsel %vm61, %v49, %v64
    %v66 = vsel %vm60, %v63, %v65
    %v67 = vsel %vm59, %v46, %v49
    %v68 = vsel %vm62, %v55, 920167782
    %v69 = vsel %vm61, %v52, %v68
    %v70 = vsel %vm60, %v67, %v69
    %v71 = vsel %vm59, %v49, %v52
    %v72 = vsel %vm62, %v58, 1326507024
    %v73 = vsel %vm61, %v55, %v72
    %v74 = vsel %vm60, %v71, %v73
    %v75 = vshll.u32 %v35, 8
    %v76 = vmul.u32.u64.compose %v75, %v74
    %v77 = vextract.low.u32 %v76
    %v78 = vextract.high.u32 %v76
    %v79 = vmul.u32.u64.compose %v75, %v70
    %v80 = vextract.low.u32 %v79
    %v81 = vextract.high.u32 %v79
    %v82 = vmul.u32 %v75, %v66
    %v83 = vadd.s32 %v78, %v80
    %vm84 = vc.u32 %v78, %v80
    %v85 = vadd.s32 %v81, 1
    %v86 = vsel %vm84, %v85, %v81
    %v87 = vadd.s32 %v82, %v86
    %v88 = vadd.s32 %v87, 536870912
    %v89 = vshrl.u32 %v88, 30
    %v90 = vshll.u32 %v89, 30
    %v91 = vsub.s32 %v87, %v90
    %vm92 = vcmp.lt.s32.totalorder %v91, 0
    %v93 = vsub.s32 0, %v91
    %v94 = vsel %vm92, %v93, %v91
    %v95 = vclz %v94
    %v96 = vsub.s32 %v95, 2
    %vm97 = vcmp.gt.s32.totalorder 0, %v96
    %v98 = vsel %vm97, 0, %v96
    %v99 = vsub.s32 32, %v98
    %v100 = vshll.u32 %v91, %v98
    %v101 = vshrl.u32 %v83, %v99
    %v102 = vor.u32 %v100, %v101
    %v103 = vsub.s32 4294967266, %v98
    %v104 = vadd.s32 %v103, 127
    %v105 = vshll.u32 %v104, 23
    %v106 = vor.u32 4788187, %v105
    %v107 = vand.u32 2147483647, %v106
    %v109 = vcvt.s32.f32 %v102
    %v110 = vmul.f32 %v109, %v107
    %v111 = vxor.u32 %v110, 2147483648
    %v112 = vsel %vm29, %v111, %v110
    %v113 = vsub.s32 4, %v89
    %v114 = vsel %vm29, %v113, %v89
    %v115 = vsel %vm28, %v23, %v112
    %v116 = vsel %vm28, 0, %v114
    %v117 = vcosq.f32.pop %v115
    %v118 = vsinq.f32.pop %v115
    %vm119 = vweird.f32 %v23
    %v120 = vadd.s32 %v116, 3
    %v121 = vand.u32 %v120, 3
    %vm122 = vcmp.lt.s32.totalorder %v121, 2
    %vm123 = vcmp.eq.s32.totalorder %v121, 0
    %v124 = vxor.u32 %v118, 2147483648
    %v125 = vsel %vm123, %v117, %v124
    %vm126 = vcmp.eq.s32.totalorder %v121, 2
    %v127 = vxor.u32 %v117, 2147483648
    %v128 = vsel %vm126, %v127, %v118
    %v129 = vsel %vm122, %v125, %v128
    %v130 = vsel %vm119, nan, %v129
    %v131 = vand.u32 2147483647, %v24
    %vm132 = vcmp.le.f32.partialorder %v131, 0.7853982
    %vm133 = vcmp.lt.s32.totalorder %v24, 0
    %v134 = vand.u32 %v24, 2139095040
    %v135 = vshrl.u32 %v134, 23
    %v136 = vsub.s32 %v135, 127
    %v137 = vand.u32 2147483647, %v24
    %v138 = vand.u32 %v137, 8388607
    %v139 = vor.u32 %v138, 8388608
    %v140 = vsub.s32 0, %v139
    %v141 = vadd.s32 %v136, 1
    %vm142 = vcmp.gt.s32.totalorder %v141, 0
    %v143 = vsel %vm142, %v141, 0
    %v144 = vshrl.u32 %v143, 5
    %v145 = vand.u32 %v143, 31
    %v146 = vsub.s32 32, %v145
    %v147 = vshrl.u32 683565275, %v146
    %v148 = vshll.u32 683565275, %v145
    %v149 = vshrl.u32 2475754826, %v146
    %v150 = vor.u32 %v148, %v149
    %v151 = vshll.u32 2475754826, %v145
    %v152 = vshrl.u32 2131351028, %v146
    %v153 = vor.u32 %v151, %v152
    %v154 = vshll.u32 2131351028, %v145
    %v155 = vshrl.u32 2102212464, %v146
    %v156 = vor.u32 %v154, %v155
    %v157 = vshll.u32 2102212464, %v145
    %v158 = vshrl.u32 920167782, %v146
    %v159 = vor.u32 %v157, %v158
    %v160 = vshll.u32 920167782, %v145
    %v161 = vshrl.u32 1326507024, %v146
    %v162 = vor.u32 %v160, %v161
    %vm163 = vcmp.lt.s32.totalorder %v144, 1
    %vm164 = vcmp.lt.s32.totalorder %v144, 2
    %vm165 = vcmp.lt.s32.totalorder %v144, 3
    %vm166 = vcmp.lt.s32.totalorder %v144, 4
    %v167 = vsel %vm163, %v147, %v150
    %v168 = vsel %vm166, %v156, 2102212464
    %v169 = vsel %vm165, %v153, %v168
    %v170 = vsel %vm164, %v167, %v169
    %v171 = vsel %vm163, %v150, %v153
    %v172 = vsel %vm166, %v159, 920167782
    %v173 = vsel %vm165, %v156, %v172
    %v174 = vsel %vm164, %v171, %v173
    %v175 = vsel %vm163, %v153, %v156
    %v176 = vsel %vm166, %v162, 1326507024
    %v177 = vsel %vm165, %v159, %v176
    %v178 = vsel %vm164, %v175, %v177
    %v179 = vshll.u32 %v139, 8
    %v180 = vmul.u32.u64.compose %v179, %v178
    %v181 = vextract.low.u32 %v180
    %v182 = vextract.high.u32 %v180
    %v183 = vmul.u32.u64.compose %v179, %v174
    %v184 = vextract.low.u32 %v183
    %v185 = vextract.high.u32 %v183
    %v186 = vmul.u32 %v179, %v170
    %v187 = vadd.s32 %v182, %v184
    %vm188 = vc.u32 %v182, %v184
    %v189 = vadd.s32 %v185, 1
    %v190 = vsel %vm188, %v189, %v185
    %v191 = vadd.s32 %v186, %v190
    %v192 = vadd.s32 %v191, 536870912
    %v193 = vshrl.u32 %v192, 30
    %v194 = vshll.u32 %v193, 30
    %v195 = vsub.s32 %v191, %v194
    %vm196 = vcmp.lt.s32.totalorder %v195, 0
    %v197 = vsub.s32 0, %v195
    %v198 = vsel %vm196, %v197, %v195
    %v199 = vclz %v198
    %v200 = vsub.s32 %v199, 2
    %vm201 = vcmp.gt.s32.totalorder 0, %v200
    %v202 = vsel %vm201, 0, %v200
    %v203 = vsub.s32 32, %v202
    %v204 = vshll.u32 %v195, %v202
    %v205 = vshrl.u32 %v187, %v203
    %v206 = vor.u32 %v204, %v205
    %v207 = vsub.s32 4294967266, %v202
    %v208 = vadd.s32 %v207, 127
    %v209 = vshll.u32 %v208, 23
    %v210 = vor.u32 4788187, %v209
    %v211 = vand.u32 2147483647, %v210
    %v213 = vcvt.s32.f32 %v206
    %v214 = vmul.f32 %v213, %v211
    %v215 = vxor.u32 %v214, 2147483648
    %v216 = vsel %vm133, %v215, %v214
    %v217 = vsub.s32 4, %v193
    %v218 = vsel %vm133, %v217, %v193
    %v219 = vsel %vm132, %v24, %v216
    %v220 = vsel %vm132, 0, %v218
    %v221 = vcosq.f32.pop %v219
    %v222 = vsinq.f32.pop %v219
    %vm223 = vweird.f32 %v24
    %v224 = vadd.s32 %v220, 3
    %v225 = vand.u32 %v224, 3
    %vm226 = vcmp.lt.s32.totalorder %v225, 2
    %vm227 = vcmp.eq.s32.totalorder %v225, 0
    %v228 = vxor.u32 %v222, 2147483648
    %v229 = vsel %vm227, %v221, %v228
    %vm230 = vcmp.eq.s32.totalorder %v225, 2
    %v231 = vxor.u32 %v221, 2147483648
    %v232 = vsel %vm230, %v231, %v222
    %v233 = vsel %vm226, %v229, %v232
    %v234 = vsel %vm223, nan, %v233
    %v235 = vand.u32 2147483647, %v23
    %vm236 = vcmp.le.f32.partialorder %v235, 0.7853982
    %vm237 = vcmp.lt.s32.totalorder %v23, 0
    %v238 = vand.u32 %v23, 2139095040
    %v239 = vshrl.u32 %v238, 23
    %v240 = vsub.s32 %v239, 127
    %v241 = vand.u32 2147483647, %v23
    %v242 = vand.u32 %v241, 8388607
    %v243 = vor.u32 %v242, 8388608
    %v244 = vsub.s32 0, %v243
    %v245 = vadd.s32 %v240, 1
    %vm246 = vcmp.gt.s32.totalorder %v245, 0
    %v247 = vsel %vm246, %v245, 0
    %v248 = vshrl.u32 %v247, 5
    %v249 = vand.u32 %v247, 31
    %v250 = vsub.s32 32, %v249
    %v251 = vshrl.u32 683565275, %v250
    %v252 = vshll.u32 683565275, %v249
    %v253 = vshrl.u32 2475754826, %v250
    %v254 = vor.u32 %v252, %v253
    %v255 = vshll.u32 2475754826, %v249
    %v256 = vshrl.u32 2131351028, %v250
    %v257 = vor.u32 %v255, %v256
    %v258 = vshll.u32 2131351028, %v249
    %v259 = vshrl.u32 2102212464, %v250
    %v260 = vor.u32 %v258, %v259
    %v261 = vshll.u32 2102212464, %v249
    %v262 = vshrl.u32 920167782, %v250
    %v263 = vor.u32 %v261, %v262
    %v264 = vshll.u32 920167782, %v249
    %v265 = vshrl.u32 1326507024, %v250
    %v266 = vor.u32 %v264, %v265
    %vm267 = vcmp.lt.s32.totalorder %v248, 1
    %vm268 = vcmp.lt.s32.totalorder %v248, 2
    %vm269 = vcmp.lt.s32.totalorder %v248, 3
    %vm270 = vcmp.lt.s32.totalorder %v248, 4
    %v271 = vsel %vm267, %v251, %v254
    %v272 = vsel %vm270, %v260, 2102212464
    %v273 = vsel %vm269, %v257, %v272
    %v274 = vsel %vm268, %v271, %v273
    %v275 = vsel %vm267, %v254, %v257
    %v276 = vsel %vm270, %v263, 920167782
    %v277 = vsel %vm269, %v260, %v276
    %v278 = vsel %vm268, %v275, %v277
    %v279 = vsel %vm267, %v257, %v260
    %v280 = vsel %vm270, %v266, 1326507024
    %v281 = vsel %vm269, %v263, %v280
    %v282 = vsel %vm268, %v279, %v281
    %v283 = vshll.u32 %v243, 8
    %v284 = vmul.u32.u64.compose %v283, %v282
    %v285 = vextract.low.u32 %v284
    %v286 = vextract.high.u32 %v284
    %v287 = vmul.u32.u64.compose %v283, %v278
    %v288 = vextract.low.u32 %v287
    %v289 = vextract.high.u32 %v287
    %v290 = vmul.u32 %v283, %v274
    %v291 = vadd.s32 %v286, %v288
    %vm292 = vc.u32 %v286, %v288
    %v293 = vadd.s32 %v289, 1
    %v294 = vsel %vm292, %v293, %v289
    %v295 = vadd.s32 %v290, %v294
    %v296 = vadd.s32 %v295, 536870912
    %v297 = vshrl.u32 %v296, 30
    %v298 = vshll.u32 %v297, 30
    %v299 = vsub.s32 %v295, %v298
    %vm300 = vcmp.lt.s32.totalorder %v299, 0
    %v301 = vsub.s32 0, %v299
    %v302 = vsel %vm300, %v301, %v299
    %v303 = vclz %v302
    %v304 = vsub.s32 %v303, 2
    %vm305 = vcmp.gt.s32.totalorder 0, %v304
    %v306 = vsel %vm305, 0, %v304
    %v307 = vsub.s32 32, %v306
    %v308 = vshll.u32 %v299, %v306
    %v309 = vshrl.u32 %v291, %v307
    %v310 = vor.u32 %v308, %v309
    %v311 = vsub.s32 4294967266, %v306
    %v312 = vadd.s32 %v311, 127
    %v313 = vshll.u32 %v312, 23
    %v314 = vor.u32 4788187, %v313
    %v315 = vand.u32 2147483647, %v314
    %v317 = vcvt.s32.f32 %v310
    %v318 = vmul.f32 %v317, %v315
    %v319 = vxor.u32 %v318, 2147483648
    %v320 = vsel %vm237, %v319, %v318
    %v321 = vsub.s32 4, %v297
    %v322 = vsel %vm237, %v321, %v297
    %v323 = vsel %vm236, %v23, %v320
    %v324 = vsel %vm236, 0, %v322
    %v325 = vcosq.f32.pop %v323
    %v326 = vsinq.f32.pop %v323
    %vm327 = vweird.f32 %v23
    %v328 = vand.u32 %v324, 3
    %vm329 = vcmp.lt.s32.totalorder %v328, 2
    %vm330 = vcmp.eq.s32.totalorder %v328, 0
    %v331 = vxor.u32 %v326, 2147483648
    %v332 = vsel %vm330, %v325, %v331
    %vm333 = vcmp.eq.s32.totalorder %v328, 2
    %v334 = vxor.u32 %v325, 2147483648
    %v335 = vsel %vm333, %v334, %v326
    %v336 = vsel %vm329, %v332, %v335
    %v337 = vsel %vm327, nan, %v336
    %v338 = vand.u32 2147483647, %v24
    %vm339 = vcmp.le.f32.partialorder %v338, 0.7853982
    %vm340 = vcmp.lt.s32.totalorder %v24, 0
    %v341 = vand.u32 %v24, 2139095040
    %v342 = vshrl.u32 %v341, 23
    %v343 = vsub.s32 %v342, 127
    %v344 = vand.u32 2147483647, %v24
    %v345 = vand.u32 %v344, 8388607
    %v346 = vor.u32 %v345, 8388608
    %v347 = vsub.s32 0, %v346
    %v348 = vadd.s32 %v343, 1
    %vm349 = vcmp.gt.s32.totalorder %v348, 0
    %v350 = vsel %vm349, %v348, 0
    %v351 = vshrl.u32 %v350, 5
    %v352 = vand.u32 %v350, 31
    %v353 = vsub.s32 32, %v352
    %v354 = vshrl.u32 683565275, %v353
    %v355 = vshll.u32 683565275, %v352
    %v356 = vshrl.u32 2475754826, %v353
    %v357 = vor.u32 %v355, %v356
    %v358 = vshll.u32 2475754826, %v352
    %v359 = vshrl.u32 2131351028, %v353
    %v360 = vor.u32 %v358, %v359
    %v361 = vshll.u32 2131351028, %v352
    %v362 = vshrl.u32 2102212464, %v353
    %v363 = vor.u32 %v361, %v362
    %v364 = vshll.u32 2102212464, %v352
    %v365 = vshrl.u32 920167782, %v353
    %v366 = vor.u32 %v364, %v365
    %v367 = vshll.u32 920167782, %v352
    %v368 = vshrl.u32 1326507024, %v353
    %v369 = vor.u32 %v367, %v368
    %vm370 = vcmp.lt.s32.totalorder %v351, 1
    %vm371 = vcmp.lt.s32.totalorder %v351, 2
    %vm372 = vcmp.lt.s32.totalorder %v351, 3
    %vm373 = vcmp.lt.s32.totalorder %v351, 4
    %v374 = vsel %vm370, %v354, %v357
    %v375 = vsel %vm373, %v363, 2102212464
    %v376 = vsel %vm372, %v360, %v375
    %v377 = vsel %vm371, %v374, %v376
    %v378 = vsel %vm370, %v357, %v360
    %v379 = vsel %vm373, %v366, 920167782
    %v380 = vsel %vm372, %v363, %v379
    %v381 = vsel %vm371, %v378, %v380
    %v382 = vsel %vm370, %v360, %v363
    %v383 = vsel %vm373, %v369, 1326507024
    %v384 = vsel %vm372, %v366, %v383
    %v385 = vsel %vm371, %v382, %v384
    %v386 = vshll.u32 %v346, 8
    %v387 = vmul.u32.u64.compose %v386, %v385
    %v388 = vextract.low.u32 %v387
    %v389 = vextract.high.u32 %v387
    %v390 = vmul.u32.u64.compose %v386, %v381
    %v391 = vextract.low.u32 %v390
    %v392 = vextract.high.u32 %v390
    %v393 = vmul.u32 %v386, %v377
    %v394 = vadd.s32 %v389, %v391
    %vm395 = vc.u32 %v389, %v391
    %v396 = vadd.s32 %v392, 1
    %v397 = vsel %vm395, %v396, %v392
    %v398 = vadd.s32 %v393, %v397
    %v399 = vadd.s32 %v398, 536870912
    %v400 = vshrl.u32 %v399, 30
    %v401 = vshll.u32 %v400, 30
    %v402 = vsub.s32 %v398, %v401
    %vm403 = vcmp.lt.s32.totalorder %v402, 0
    %v404 = vsub.s32 0, %v402
    %v405 = vsel %vm403, %v404, %v402
    %v406 = vclz %v405
    %v407 = vsub.s32 %v406, 2
    %vm408 = vcmp.gt.s32.totalorder 0, %v407
    %v409 = vsel %vm408, 0, %v407
    %v410 = vsub.s32 32, %v409
    %v411 = vshll.u32 %v402, %v409
    %v412 = vshrl.u32 %v394, %v410
    %v413 = vor.u32 %v411, %v412
    %v414 = vsub.s32 4294967266, %v409
    %v415 = vadd.s32 %v414, 127
    %v416 = vshll.u32 %v415, 23
    %v417 = vor.u32 4788187, %v416
    %v418 = vand.u32 2147483647, %v417
    %v420 = vcvt.s32.f32 %v413
    %v421 = vmul.f32 %v420, %v418
    %v422 = vxor.u32 %v421, 2147483648
    %v423 = vsel %vm340, %v422, %v421
    %v424 = vsub.s32 4, %v400
    %v425 = vsel %vm340, %v424, %v400
    %v426 = vsel %vm339, %v24, %v423
    %v427 = vsel %vm339, 0, %v425
    %v428 = vcosq.f32.pop %v426
    %v429 = vsinq.f32.pop %v426
    %vm430 = vweird.f32 %v24
    %v431 = vand.u32 %v427, 3
    %vm432 = vcmp.lt.s32.totalorder %v431, 2
    %vm433 = vcmp.eq.s32.totalorder %v431, 0
    %v434 = vxor.u32 %v429, 2147483648
    %v435 = vsel %vm433, %v428, %v434
    %vm436 = vcmp.eq.s32.totalorder %v431, 2
    %v437 = vxor.u32 %v428, 2147483648
    %v438 = vsel %vm436, %v437, %v429
    %v439 = vsel %vm432, %v435, %v438
    %v440 = vsel %vm430, nan, %v439
    %s441 = scalar_lea.vmem [#allocation5], 16
    %442 = vst [vmem:[%s441] sm:$0xff] %v130
    %443 = vst [vmem:[%s441 + $0x8] sm:$0xff] %v234
    %s444 = scalar_lea.vmem [#allocation5], 32
    %445 = vst [vmem:[%s444] sm:$0xff] %v337
    %446 = vst [vmem:[%s444 + $0x8] sm:$0xff] %v440
    %v447 = vmul.f32 %v130, %v337
    %v448 = vmul.f32 %v234, %v440
    %v449 = vmul.f32 %v447, 2.0
    %v450 = vmul.f32 %v448, 2.0
    %v451 = vmul.f32 %v337, %v337
    %v452 = vmul.f32 %v440, %v440
    %v453 = vmul.f32 %v130, %v130
    %v454 = vmul.f32 %v234, %v234
    %v455 = vsub.f32 %v451, %v453
    %v456 = vsub.f32 %v452, %v454
    %s457 = scalar_lea.vmem [#allocation5], 48
    %458 = vst [vmem:[%s457] sm:$0xff] %v449
    %459 = vst [vmem:[%s457 + $0x8] sm:$0xff] %v450
    %s460 = scalar_lea.vmem [#allocation5], 64
    %461 = vst [vmem:[%s460] sm:$0xff] %v455
    %462 = vst [vmem:[%s460 + $0x8] sm:$0xff] %v456
    %v463 = vmul.f32 %v449, %v455
    %v464 = vmul.f32 %v450, %v456
    %v465 = vmul.f32 %v463, 2.0
    %v466 = vmul.f32 %v464, 2.0
    %v467 = vmul.f32 %v455, %v455
    %v468 = vmul.f32 %v456, %v456
    %v469 = vmul.f32 %v449, %v449
    %v470 = vmul.f32 %v450, %v450
    %v471 = vsub.f32 %v467, %v469
    %v472 = vsub.f32 %v468, %v470
    %s473 = scalar_lea.vmem [#allocation5], 80
    %474 = vst [vmem:[%s473] sm:$0xff] %v465
    %475 = vst [vmem:[%s473 + $0x8] sm:$0xff] %v466
    %s476 = scalar_lea.vmem [#allocation5], 96
    %477 = vst [vmem:[%s476] sm:$0xff] %v471
    %478 = vst [vmem:[%s476 + $0x8] sm:$0xff] %v472
    %v479 = vmul.f32 %v23, 8.0
    %v480 = vmul.f32 %v24, 8.0
    %v481 = vand.u32 2147483647, %v479
    %vm482 = vcmp.le.f32.partialorder %v481, 0.7853982
    %vm483 = vcmp.lt.s32.totalorder %v479, 0
    %v484 = vand.u32 %v479, 2139095040
    %v485 = vshrl.u32 %v484, 23
    %v486 = vsub.s32 %v485, 127
    %v487 = vand.u32 2147483647, %v479
    %v488 = vand.u32 %v487, 8388607
    %v489 = vor.u32 %v488, 8388608
    %v490 = vsub.s32 0, %v489
    %v491 = vadd.s32 %v486, 1
    %vm492 = vcmp.gt.s32.totalorder %v491, 0
    %v493 = vsel %vm492, %v491, 0
    %v494 = vshrl.u32 %v493, 5
    %v495 = vand.u32 %v493, 31
    %v496 = vsub.s32 32, %v495
    %v497 = vshrl.u32 683565275, %v496
    %v498 = vshll.u32 683565275, %v495
    %v499 = vshrl.u32 2475754826, %v496
    %v500 = vor.u32 %v498, %v499
    %v501 = vshll.u32 2475754826, %v495
    %v502 = vshrl.u32 2131351028, %v496
    %v503 = vor.u32 %v501, %v502
    %v504 = vshll.u32 2131351028, %v495
    %v505 = vshrl.u32 2102212464, %v496
    %v506 = vor.u32 %v504, %v505
    %v507 = vshll.u32 2102212464, %v495
    %v508 = vshrl.u32 920167782, %v496
    %v509 = vor.u32 %v507, %v508
    %v510 = vshll.u32 920167782, %v495
    %v511 = vshrl.u32 1326507024, %v496
    %v512 = vor.u32 %v510, %v511
    %vm513 = vcmp.lt.s32.totalorder %v494, 1
    %vm514 = vcmp.lt.s32.totalorder %v494, 2
    %vm515 = vcmp.lt.s32.totalorder %v494, 3
    %vm516 = vcmp.lt.s32.totalorder %v494, 4
    %v517 = vsel %vm513, %v497, %v500
    %v518 = vsel %vm516, %v506, 2102212464
    %v519 = vsel %vm515, %v503, %v518
    %v520 = vsel %vm514, %v517, %v519
    %v521 = vsel %vm513, %v500, %v503
    %v522 = vsel %vm516, %v509, 920167782
    %v523 = vsel %vm515, %v506, %v522
    %v524 = vsel %vm514, %v521, %v523
    %v525 = vsel %vm513, %v503, %v506
    %v526 = vsel %vm516, %v512, 1326507024
    %v527 = vsel %vm515, %v509, %v526
    %v528 = vsel %vm514, %v525, %v527
    %v529 = vshll.u32 %v489, 8
    %v530 = vmul.u32.u64.compose %v529, %v528
    %v531 = vextract.low.u32 %v530
    %v532 = vextract.high.u32 %v530
    %v533 = vmul.u32.u64.compose %v529, %v524
    %v534 = vextract.low.u32 %v533
    %v535 = vextract.high.u32 %v533
    %v536 = vmul.u32 %v529, %v520
    %v537 = vadd.s32 %v532, %v534
    %vm538 = vc.u32 %v532, %v534
    %v539 = vadd.s32 %v535, 1
    %v540 = vsel %vm538, %v539, %v535
    %v541 = vadd.s32 %v536, %v540
    %v542 = vadd.s32 %v541, 536870912
    %v543 = vshrl.u32 %v542, 30
    %v544 = vshll.u32 %v543, 30
    %v545 = vsub.s32 %v541, %v544
    %vm546 = vcmp.lt.s32.totalorder %v545, 0
    %v547 = vsub.s32 0, %v545
    %v548 = vsel %vm546, %v547, %v545
    %v549 = vclz %v548
    %v550 = vsub.s32 %v549, 2
    %vm551 = vcmp.gt.s32.totalorder 0, %v550
    %v552 = vsel %vm551, 0, %v550
    %v553 = vsub.s32 32, %v552
    %v554 = vshll.u32 %v545, %v552
    %v555 = vshrl.u32 %v537, %v553
    %v556 = vor.u32 %v554, %v555
    %v557 = vsub.s32 4294967266, %v552
    %v558 = vadd.s32 %v557, 127
    %v559 = vshll.u32 %v558, 23
    %v560 = vor.u32 4788187, %v559
    %v561 = vand.u32 2147483647, %v560
    %v563 = vcvt.s32.f32 %v556
    %v564 = vmul.f32 %v563, %v561
    %v565 = vxor.u32 %v564, 2147483648
    %v566 = vsel %vm483, %v565, %v564
    %v567 = vsub.s32 4, %v543
    %v568 = vsel %vm483, %v567, %v543
    %v569 = vsel %vm482, %v479, %v566
    %v570 = vsel %vm482, 0, %v568
    %v571 = vcosq.f32.pop %v569
    %v572 = vsinq.f32.pop %v569
    %vm573 = vweird.f32 %v479
    %v574 = vadd.s32 %v570, 3
    %v575 = vand.u32 %v574, 3
    %vm576 = vcmp.lt.s32.totalorder %v575, 2
    %vm577 = vcmp.eq.s32.totalorder %v575, 0
    %v578 = vxor.u32 %v572, 2147483648
    %v579 = vsel %vm577, %v571, %v578
    %vm580 = vcmp.eq.s32.totalorder %v575, 2
    %v581 = vxor.u32 %v571, 2147483648
    %v582 = vsel %vm580, %v581, %v572
    %v583 = vsel %vm576, %v579, %v582
    %v584 = vsel %vm573, nan, %v583
    %v585 = vand.u32 2147483647, %v480
    %vm586 = vcmp.le.f32.partialorder %v585, 0.7853982
    %vm587 = vcmp.lt.s32.totalorder %v480, 0
    %v588 = vand.u32 %v480, 2139095040
    %v589 = vshrl.u32 %v588, 23
    %v590 = vsub.s32 %v589, 127
    %v591 = vand.u32 2147483647, %v480
    %v592 = vand.u32 %v591, 8388607
    %v593 = vor.u32 %v592, 8388608
    %v594 = vsub.s32 0, %v593
    %v595 = vadd.s32 %v590, 1
    %vm596 = vcmp.gt.s32.totalorder %v595, 0
    %v597 = vsel %vm596, %v595, 0
    %v598 = vshrl.u32 %v597, 5
    %v599 = vand.u32 %v597, 31
    %v600 = vsub.s32 32, %v599
    %v601 = vshrl.u32 683565275, %v600
    %v602 = vshll.u32 683565275, %v599
    %v603 = vshrl.u32 2475754826, %v600
    %v604 = vor.u32 %v602, %v603
    %v605 = vshll.u32 2475754826, %v599
    %v606 = vshrl.u32 2131351028, %v600
    %v607 = vor.u32 %v605, %v606
    %v608 = vshll.u32 2131351028, %v599
    %v609 = vshrl.u32 2102212464, %v600
    %v610 = vor.u32 %v608, %v609
    %v611 = vshll.u32 2102212464, %v599
    %v612 = vshrl.u32 920167782, %v600
    %v613 = vor.u32 %v611, %v612
    %v614 = vshll.u32 920167782, %v599
    %v615 = vshrl.u32 1326507024, %v600
    %v616 = vor.u32 %v614, %v615
    %vm617 = vcmp.lt.s32.totalorder %v598, 1
    %vm618 = vcmp.lt.s32.totalorder %v598, 2
    %vm619 = vcmp.lt.s32.totalorder %v598, 3
    %vm620 = vcmp.lt.s32.totalorder %v598, 4
    %v621 = vsel %vm617, %v601, %v604
    %v622 = vsel %vm620, %v610, 2102212464
    %v623 = vsel %vm619, %v607, %v622
    %v624 = vsel %vm618, %v621, %v623
    %v625 = vsel %vm617, %v604, %v607
    %v626 = vsel %vm620, %v613, 920167782
    %v627 = vsel %vm619, %v610, %v626
    %v628 = vsel %vm618, %v625, %v627
    %v629 = vsel %vm617, %v607, %v610
    %v630 = vsel %vm620, %v616, 1326507024
    %v631 = vsel %vm619, %v613, %v630
    %v632 = vsel %vm618, %v629, %v631
    %v633 = vshll.u32 %v593, 8
    %v634 = vmul.u32.u64.compose %v633, %v632
    %v635 = vextract.low.u32 %v634
    %v636 = vextract.high.u32 %v634
    %v637 = vmul.u32.u64.compose %v633, %v628
    %v638 = vextract.low.u32 %v637
    %v639 = vextract.high.u32 %v637
    %v640 = vmul.u32 %v633, %v624
    %v641 = vadd.s32 %v636, %v638
    %vm642 = vc.u32 %v636, %v638
    %v643 = vadd.s32 %v639, 1
    %v644 = vsel %vm642, %v643, %v639
    %v645 = vadd.s32 %v640, %v644
    %v646 = vadd.s32 %v645, 536870912
    %v647 = vshrl.u32 %v646, 30
    %v648 = vshll.u32 %v647, 30
    %v649 = vsub.s32 %v645, %v648
    %vm650 = vcmp.lt.s32.totalorder %v649, 0
    %v651 = vsub.s32 0, %v649
    %v652 = vsel %vm650, %v651, %v649
    %v653 = vclz %v652
    %v654 = vsub.s32 %v653, 2
    %vm655 = vcmp.gt.s32.totalorder 0, %v654
    %v656 = vsel %vm655, 0, %v654
    %v657 = vsub.s32 32, %v656
    %v658 = vshll.u32 %v649, %v656
    %v659 = vshrl.u32 %v641, %v657
    %v660 = vor.u32 %v658, %v659
    %v661 = vsub.s32 4294967266, %v656
    %v662 = vadd.s32 %v661, 127
    %v663 = vshll.u32 %v662, 23
    %v664 = vor.u32 4788187, %v663
    %v665 = vand.u32 2147483647, %v664
    %v667 = vcvt.s32.f32 %v660
    %v668 = vmul.f32 %v667, %v665
    %v669 = vxor.u32 %v668, 2147483648
    %v670 = vsel %vm587, %v669, %v668
    %v671 = vsub.s32 4, %v647
    %v672 = vsel %vm587, %v671, %v647
    %v673 = vsel %vm586, %v480, %v670
    %v674 = vsel %vm586, 0, %v672
    %v675 = vcosq.f32.pop %v673
    %v676 = vsinq.f32.pop %v673
    %vm677 = vweird.f32 %v480
    %v678 = vadd.s32 %v674, 3
    %v679 = vand.u32 %v678, 3
    %vm680 = vcmp.lt.s32.totalorder %v679, 2
    %vm681 = vcmp.eq.s32.totalorder %v679, 0
    %v682 = vxor.u32 %v676, 2147483648
    %v683 = vsel %vm681, %v675, %v682
    %vm684 = vcmp.eq.s32.totalorder %v679, 2
    %v685 = vxor.u32 %v675, 2147483648
    %v686 = vsel %vm684, %v685, %v676
    %v687 = vsel %vm680, %v683, %v686
    %v688 = vsel %vm677, nan, %v687
    %v689 = vand.u32 2147483647, %v479
    %vm690 = vcmp.le.f32.partialorder %v689, 0.7853982
    %vm691 = vcmp.lt.s32.totalorder %v479, 0
    %v692 = vand.u32 %v479, 2139095040
    %v693 = vshrl.u32 %v692, 23
    %v694 = vsub.s32 %v693, 127
    %v695 = vand.u32 2147483647, %v479
    %v696 = vand.u32 %v695, 8388607
    %v697 = vor.u32 %v696, 8388608
    %v698 = vsub.s32 0, %v697
    %v699 = vadd.s32 %v694, 1
    %vm700 = vcmp.gt.s32.totalorder %v699, 0
    %v701 = vsel %vm700, %v699, 0
    %v702 = vshrl.u32 %v701, 5
    %v703 = vand.u32 %v701, 31
    %v704 = vsub.s32 32, %v703
    %v705 = vshrl.u32 683565275, %v704
    %v706 = vshll.u32 683565275, %v703
    %v707 = vshrl.u32 2475754826, %v704
    %v708 = vor.u32 %v706, %v707
    %v709 = vshll.u32 2475754826, %v703
    %v710 = vshrl.u32 2131351028, %v704
    %v711 = vor.u32 %v709, %v710
    %v712 = vshll.u32 2131351028, %v703
    %v713 = vshrl.u32 2102212464, %v704
    %v714 = vor.u32 %v712, %v713
    %v715 = vshll.u32 2102212464, %v703
    %v716 = vshrl.u32 920167782, %v704
    %v717 = vor.u32 %v715, %v716
    %v718 = vshll.u32 920167782, %v703
    %v719 = vshrl.u32 1326507024, %v704
    %v720 = vor.u32 %v718, %v719
    %vm721 = vcmp.lt.s32.totalorder %v702, 1
    %vm722 = vcmp.lt.s32.totalorder %v702, 2
    %vm723 = vcmp.lt.s32.totalorder %v702, 3
    %vm724 = vcmp.lt.s32.totalorder %v702, 4
    %v725 = vsel %vm721, %v705, %v708
    %v726 = vsel %vm724, %v714, 2102212464
    %v727 = vsel %vm723, %v711, %v726
    %v728 = vsel %vm722, %v725, %v727
    %v729 = vsel %vm721, %v708, %v711
    %v730 = vsel %vm724, %v717, 920167782
    %v731 = vsel %vm723, %v714, %v730
    %v732 = vsel %vm722, %v729, %v731
    %v733 = vsel %vm721, %v711, %v714
    %v734 = vsel %vm724, %v720, 1326507024
    %v735 = vsel %vm723, %v717, %v734
    %v736 = vsel %vm722, %v733, %v735
    %v737 = vshll.u32 %v697, 8
    %v738 = vmul.u32.u64.compose %v737, %v736
    %v739 = vextract.low.u32 %v738
    %v740 = vextract.high.u32 %v738
    %v741 = vmul.u32.u64.compose %v737, %v732
    %v742 = vextract.low.u32 %v741
    %v743 = vextract.high.u32 %v741
    %v744 = vmul.u32 %v737, %v728
    %v745 = vadd.s32 %v740, %v742
    %vm746 = vc.u32 %v740, %v742
    %v747 = vadd.s32 %v743, 1
    %v748 = vsel %vm746, %v747, %v743
    %v749 = vadd.s32 %v744, %v748
    %v750 = vadd.s32 %v749, 536870912
    %v751 = vshrl.u32 %v750, 30
    %v752 = vshll.u32 %v751, 30
    %v753 = vsub.s32 %v749, %v752
    %vm754 = vcmp.lt.s32.totalorder %v753, 0
    %v755 = vsub.s32 0, %v753
    %v756 = vsel %vm754, %v755, %v753
    %v757 = vclz %v756
    %v758 = vsub.s32 %v757, 2
    %vm759 = vcmp.gt.s32.totalorder 0, %v758
    %v760 = vsel %vm759, 0, %v758
    %v761 = vsub.s32 32, %v760
    %v762 = vshll.u32 %v753, %v760
    %v763 = vshrl.u32 %v745, %v761
    %v764 = vor.u32 %v762, %v763
    %v765 = vsub.s32 4294967266, %v760
    %v766 = vadd.s32 %v765, 127
    %v767 = vshll.u32 %v766, 23
    %v768 = vor.u32 4788187, %v767
    %v769 = vand.u32 2147483647, %v768
    %v771 = vcvt.s32.f32 %v764
    %v772 = vmul.f32 %v771, %v769
    %v773 = vxor.u32 %v772, 2147483648
    %v774 = vsel %vm691, %v773, %v772
    %v775 = vsub.s32 4, %v751
    %v776 = vsel %vm691, %v775, %v751
    %v777 = vsel %vm690, %v479, %v774
    %v778 = vsel %vm690, 0, %v776
    %v779 = vcosq.f32.pop %v777
    %v780 = vsinq.f32.pop %v777
    %vm781 = vweird.f32 %v479
    %v782 = vand.u32 %v778, 3
    %vm783 = vcmp.lt.s32.totalorder %v782, 2
    %vm784 = vcmp.eq.s32.totalorder %v782, 0
    %v785 = vxor.u32 %v780, 2147483648
    %v786 = vsel %vm784, %v779, %v785
    %vm787 = vcmp.eq.s32.totalorder %v782, 2
    %v788 = vxor.u32 %v779, 2147483648
    %v789 = vsel %vm787, %v788, %v780
    %v790 = vsel %vm783, %v786, %v789
    %v791 = vsel %vm781, nan, %v790
    %v792 = vand.u32 2147483647, %v480
    %vm793 = vcmp.le.f32.partialorder %v792, 0.7853982
    %vm794 = vcmp.lt.s32.totalorder %v480, 0
    %v795 = vand.u32 %v480, 2139095040
    %v796 = vshrl.u32 %v795, 23
    %v797 = vsub.s32 %v796, 127
    %v798 = vand.u32 2147483647, %v480
    %v799 = vand.u32 %v798, 8388607
    %v800 = vor.u32 %v799, 8388608
    %v801 = vsub.s32 0, %v800
    %v802 = vadd.s32 %v797, 1
    %vm803 = vcmp.gt.s32.totalorder %v802, 0
    %v804 = vsel %vm803, %v802, 0
    %v805 = vshrl.u32 %v804, 5
    %v806 = vand.u32 %v804, 31
    %v807 = vsub.s32 32, %v806
    %v808 = vshrl.u32 683565275, %v807
    %v809 = vshll.u32 683565275, %v806
    %v810 = vshrl.u32 2475754826, %v807
    %v811 = vor.u32 %v809, %v810
    %v812 = vshll.u32 2475754826, %v806
    %v813 = vshrl.u32 2131351028, %v807
    %v814 = vor.u32 %v812, %v813
    %v815 = vshll.u32 2131351028, %v806
    %v816 = vshrl.u32 2102212464, %v807
    %v817 = vor.u32 %v815, %v816
    %v818 = vshll.u32 2102212464, %v806
    %v819 = vshrl.u32 920167782, %v807
    %v820 = vor.u32 %v818, %v819
    %v821 = vshll.u32 920167782, %v806
    %v822 = vshrl.u32 1326507024, %v807
    %v823 = vor.u32 %v821, %v822
    %vm824 = vcmp.lt.s32.totalorder %v805, 1
    %vm825 = vcmp.lt.s32.totalorder %v805, 2
    %vm826 = vcmp.lt.s32.totalorder %v805, 3
    %vm827 = vcmp.lt.s32.totalorder %v805, 4
    %v828 = vsel %vm824, %v808, %v811
    %v829 = vsel %vm827, %v817, 2102212464
    %v830 = vsel %vm826, %v814, %v829
    %v831 = vsel %vm825, %v828, %v830
    %v832 = vsel %vm824, %v811, %v814
    %v833 = vsel %vm827, %v820, 920167782
    %v834 = vsel %vm826, %v817, %v833
    %v835 = vsel %vm825, %v832, %v834
    %v836 = vsel %vm824, %v814, %v817
    %v837 = vsel %vm827, %v823, 1326507024
    %v838 = vsel %vm826, %v820, %v837
    %v839 = vsel %vm825, %v836, %v838
    %v840 = vshll.u32 %v800, 8
    %v841 = vmul.u32.u64.compose %v840, %v839
    %v842 = vextract.low.u32 %v841
    %v843 = vextract.high.u32 %v841
    %v844 = vmul.u32.u64.compose %v840, %v835
    %v845 = vextract.low.u32 %v844
    %v846 = vextract.high.u32 %v844
    %v847 = vmul.u32 %v840, %v831
    %v848 = vadd.s32 %v843, %v845
    %vm849 = vc.u32 %v843, %v845
    %v850 = vadd.s32 %v846, 1
    %v851 = vsel %vm849, %v850, %v846
    %v852 = vadd.s32 %v847, %v851
    %v853 = vadd.s32 %v852, 536870912
    %v854 = vshrl.u32 %v853, 30
    %v855 = vshll.u32 %v854, 30
    %v856 = vsub.s32 %v852, %v855
    %vm857 = vcmp.lt.s32.totalorder %v856, 0
    %v858 = vsub.s32 0, %v856
    %v859 = vsel %vm857, %v858, %v856
    %v860 = vclz %v859
    %v861 = vsub.s32 %v860, 2
    %vm862 = vcmp.gt.s32.totalorder 0, %v861
    %v863 = vsel %vm862, 0, %v861
    %v864 = vsub.s32 32, %v863
    %v865 = vshll.u32 %v856, %v863
    %v866 = vshrl.u32 %v848, %v864
    %v867 = vor.u32 %v865, %v866
    %v868 = vsub.s32 4294967266, %v863
    %v869 = vadd.s32 %v868, 127
    %v870 = vshll.u32 %v869, 23
    %v871 = vor.u32 4788187, %v870
    %v872 = vand.u32 2147483647, %v871
    %v874 = vcvt.s32.f32 %v867
    %v875 = vmul.f32 %v874, %v872
    %v876 = vxor.u32 %v875, 2147483648
    %v877 = vsel %vm794, %v876, %v875
    %v878 = vsub.s32 4, %v854
    %v879 = vsel %vm794, %v878, %v854
    %v880 = vsel %vm793, %v480, %v877
    %v881 = vsel %vm793, 0, %v879
    %v882 = vcosq.f32.pop %v880
    %v883 = vsinq.f32.pop %v880
    %vm884 = vweird.f32 %v480
    %v885 = vand.u32 %v881, 3
    %vm886 = vcmp.lt.s32.totalorder %v885, 2
    %vm887 = vcmp.eq.s32.totalorder %v885, 0
    %v888 = vxor.u32 %v883, 2147483648
    %v889 = vsel %vm887, %v882, %v888
    %vm890 = vcmp.eq.s32.totalorder %v885, 2
    %v891 = vxor.u32 %v882, 2147483648
    %v892 = vsel %vm890, %v891, %v883
    %v893 = vsel %vm886, %v889, %v892
    %v894 = vsel %vm884, nan, %v893
    %s895 = scalar_lea.vmem [#allocation5], 112
    %896 = vst [vmem:[%s895] sm:$0xff] %v584
    %897 = vst [vmem:[%s895 + $0x8] sm:$0xff] %v688
    %s898 = scalar_lea.vmem [#allocation5], 128
    %899 = vst [vmem:[%s898] sm:$0xff] %v791
    %900 = vst [vmem:[%s898 + $0x8] sm:$0xff] %v894
    %v901 = vmul.f32 %v584, %v791
    %v902 = vmul.f32 %v688, %v894
    %v903 = vmul.f32 %v901, 2.0
    %v904 = vmul.f32 %v902, 2.0
    %v905 = vmul.f32 %v791, %v791
    %v906 = vmul.f32 %v894, %v894
    %v907 = vmul.f32 %v584, %v584
    %v908 = vmul.f32 %v688, %v688
    %v909 = vsub.f32 %v905, %v907
    %v910 = vsub.f32 %v906, %v908
    %s911 = scalar_lea.vmem [#allocation5], 144
    %912 = vst [vmem:[%s911] sm:$0xff] %v903
    %913 = vst [vmem:[%s911 + $0x8] sm:$0xff] %v904
    %s914 = scalar_lea.vmem [#allocation5], 160
    %915 = vst [vmem:[%s914] sm:$0xff] %v909
    %916 = vst [vmem:[%s914 + $0x8] sm:$0xff] %v910
    %v917 = vmul.f32 %v903, %v909
    %v918 = vmul.f32 %v904, %v910
    %v919 = vmul.f32 %v917, 2.0
    %v920 = vmul.f32 %v918, 2.0
    %v921 = vmul.f32 %v909, %v909
    %v922 = vmul.f32 %v910, %v910
    %v923 = vmul.f32 %v903, %v903
    %v924 = vmul.f32 %v904, %v904
    %v925 = vsub.f32 %v921, %v923
    %v926 = vsub.f32 %v922, %v924
    %s927 = scalar_lea.vmem [#allocation5], 176
    %928 = vst [vmem:[%s927] sm:$0xff] %v919
    %929 = vst [vmem:[%s927 + $0x8] sm:$0xff] %v920
    %s930 = scalar_lea.vmem [#allocation5], 192
    %931 = vst [vmem:[%s930] sm:$0xff] %v925
    %932 = vst [vmem:[%s930 + $0x8] sm:$0xff] %v926
    // Predicated region
    $region10: #{tpu_custom_call.1} parent=1 // pred_check
      _
    $region11: #{tpu_custom_call.1} parent=1 // pred_check_branch
      %934 = sbr.rel (0) target = $region13
    $region12: #{tpu_custom_call.1} parent=1 // pred_region
      %s936 = ssub.s32 3328, 3328
      %937 = vsyncadd [#allocation4], %s936
      %s938 = sshll.u32 [#allocation5], 4
      %s939 = int_to_ptr.vmem [resolvable:$true] %s938
      %944 = dma.vmem_to_hbm [thread:$0]  %s939, 3328, %s1, [#allocation4], 128, 128, 8
    $region13: #{tpu_custom_call.1} parent=1 // pred_fallthru
      _
    // Predicated region
    $region14: #{tpu_custom_call.1} parent=1 // pred_check
      _
    $region15: #{tpu_custom_call.1} parent=1 // pred_check_branch
      %946 = sbr.rel (0) target = $region17
    $region16: #{tpu_custom_call.1} parent=1 // pred_region
      %947 = dma.done [#allocation4], 3328
    $region17: #{tpu_custom_call.1} parent=1 // pred_fallthru
      _
    %948 = vsyncpa [#allocation3], 1
    %949 = vsyncpa [#allocation4], 1

</llo_original>
